<compile_context>
chip_gen: v7x
topology: tpu7x:2x2x1
jax: 0.10.0
libtpu: 0.0.40
codegen_flags: <defaults>
</compile_context>

<pallas_src>
import functools

import jax
import jax.numpy as jnp
from jax.experimental import pallas as pl
from jax.experimental.pallas import tpu as pltpu


def _cdiv(a: int, b: int) -> int:
    return (a + b - 1) // b


def _round_up(x: int, m: int) -> int:
    return _cdiv(x, m) * m


def _pick_lane_tile(dim: int, cap: int) -> int:
    """Largest multiple of 128 that divides round_up(dim, 128) and is <= cap."""
    d = _round_up(dim, 128)
    best = 128
    t = 256
    while t <= min(d, cap):
        if d % t == 0:
            best = t
        t += 128
    return best


# ----------------------------- kernel bodies ------------------------------ #
# Single K pass (whole contraction in one tile): no scratch, no branches.

def _eq_kernel_1pass_bias(x_ref, w_ref, b_ref, o_ref, *, lr_mul):
    acc = jnp.dot(x_ref[...], w_ref[...], preferred_element_type=jnp.float32)
    o_ref[...] = acc * lr_mul + b_ref[...]


def _eq_kernel_1pass_nobias(x_ref, w_ref, o_ref, *, lr_mul):
    acc = jnp.dot(x_ref[...], w_ref[...], preferred_element_type=jnp.float32)
    o_ref[...] = acc * lr_mul


# K-tiled: accumulate directly into the resident f32 output block (its index
# map ignores k, so it stays in VMEM across the whole k sweep).

def _eq_kernel_ktiled_bias(x_ref, w_ref, b_ref, o_ref, *, lr_mul):
    k = pl.program_id(2)

    @pl.when(k == 0)
    def _init():
        o_ref[...] = jnp.zeros_like(o_ref)

    o_ref[...] += jnp.dot(x_ref[...], w_ref[...],
                          preferred_element_type=jnp.float32)

    @pl.when(k == pl.num_programs(2) - 1)
    def _finalize():
        o_ref[...] = o_ref[...] * lr_mul + b_ref[...]


def _eq_kernel_ktiled_nobias(x_ref, w_ref, o_ref, *, lr_mul):
    k = pl.program_id(2)

    @pl.when(k == 0)
    def _init():
        o_ref[...] = jnp.zeros_like(o_ref)

    o_ref[...] += jnp.dot(x_ref[...], w_ref[...],
                          preferred_element_type=jnp.float32)

    @pl.when(k == pl.num_programs(2) - 1)
    def _finalize():
        o_ref[...] = o_ref[...] * lr_mul


# ------------------------------- reference --------------------------------- #

def eq_linear_ref(x, w, b=None, lr_mul: float = 0.1):
    """Pure-JAX reference matching F.linear(x, w*lr_mul, b*lr_mul)."""
    y = jnp.dot(x, (w * lr_mul).T, precision=jax.lax.Precision.HIGHEST)
    if b is not None:
        y = y + b * lr_mul
    return y


# -------------------------------- wrapper ---------------------------------- #

def eq_linear(x, w, b=None, lr_mul: float = 0.1, *,
              compute_dtype=None, min_pallas_elems: int = 1 << 21):
    """x: (..., in_dim), w: (out_dim, in_dim), b: (out_dim,) or None."""
    *lead, in_dim = x.shape
    out_dim, in_dim_w = w.shape
    assert in_dim == in_dim_w, "weight/input dim mismatch"

    x2 = x.reshape(-1, in_dim)
    batch = x2.shape[0]
    out_dtype = x.dtype

    # Tiny GEMMs: per-pallas_call fixed overhead dominates; XLA dot wins.
    if batch * in_dim * out_dim < min_pallas_elems:
        y = eq_linear_ref(x2, w, b, lr_mul).astype(out_dtype)
        return y.reshape(*lead, out_dim)

    op_dtype = jnp.dtype(compute_dtype) if compute_dtype is not None else jnp.dtype(x.dtype)
    itemsize = op_dtype.itemsize
    sublane = 8 if itemsize >= 4 else (16 if itemsize == 2 else 32)

    # ---- tile selection (lane-dense, waste-aware, VMEM-bounded) ---- #
    K = _round_up(in_dim, 128)                       # only dim that needs zero-pad
    tm = min(512, _round_up(_cdiv(batch, _cdiv(batch, 512)), sublane))
    tn = _pick_lane_tile(out_dim, 512)
    tk = _pick_lane_tile(K, 1024)                    # exact divisor of K

    gm = _cdiv(batch, tm)
    gn = _cdiv(out_dim, tn)
    # v7x: make sure both TensorCores get at least one (i, j) block.
    if gm * gn < 2:
        can_split_n = (tn % 256 == 0)                # halved tile stays a 128-multiple
        can_split_m = (tm >= 2 * sublane)
        if can_split_n and (batch <= out_dim or not can_split_m):
            tn //= 2
        elif can_split_m:
            tm = _round_up(tm // 2, sublane)
        gm = _cdiv(batch, tm)
        gn = _cdiv(out_dim, tn)
    gk = K // tk

    # ---- operand prep: K zero-pad only; canonical (K, N) weight layout ---- #
    xp = x2 if K == in_dim else jnp.pad(x2, ((0, 0), (0, K - in_dim)))
    wT = w.T
    wTp = wT if K == in_dim else jnp.pad(wT, ((0, K - in_dim), (0, 0)))
    if compute_dtype is not None:
        xp = xp.astype(compute_dtype)
        wTp = wTp.astype(compute_dtype)

    lr = float(lr_mul)
    has_bias = b is not None
    if has_bias:
        b_scaled = (b.astype(jnp.float32) * lr).reshape(1, out_dim)

    # Double-buffered working-set estimate; keep explicit limit <= 48 MiB (v7x-safe).
    vmem_bytes = 2 * (tm * tk + tk * tn) * itemsize + 2 * tm * tn * 4 + 2 * tn * 4
    vmem_limit = min(48 * 1024 * 1024, max(2 * vmem_bytes, 24 * 1024 * 1024))
    dims = ("parallel", "parallel", "arbitrary") if gk > 1 else ("parallel", "parallel")
    compiler_params = pltpu.CompilerParams(
        dimension_semantics=dims, vmem_limit_bytes=vmem_limit)

    cost = pl.CostEstimate(
        flops=2 * batch * out_dim * K,
        transcendentals=0,
        bytes_accessed=(xp.size * itemsize + wTp.size * itemsize
                        + batch * out_dim * 4 + (out_dim * 4 if has_bias else 0)))

    if gk == 1:
        grid = (gm, gn)
        x_spec = pl.BlockSpec((tm, tk), lambda i, j: (i, 0))
        w_spec = pl.BlockSpec((tk, tn), lambda i, j: (0, j))
        b_spec = pl.BlockSpec((1, tn), lambda i, j: (0, j))
        o_spec = pl.BlockSpec((tm, tn), lambda i, j: (i, j))
        kern_bias, kern_nobias = _eq_kernel_1pass_bias, _eq_kernel_1pass_nobias
    else:
        grid = (gm, gn, gk)
        x_spec = pl.BlockSpec((tm, tk), lambda i, j, k: (i, k))
        w_spec = pl.BlockSpec((tk, tn), lambda i, j, k: (k, j))
        b_spec = pl.BlockSpec((1, tn), lambda i, j, k: (0, j))
        o_spec = pl.BlockSpec((tm, tn), lambda i, j, k: (i, j))
        kern_bias, kern_nobias = _eq_kernel_ktiled_bias, _eq_kernel_ktiled_nobias

    if has_bias:
        kernel = functools.partial(kern_bias, lr_mul=lr)
        in_specs = [x_spec, w_spec, b_spec]
        operands = (xp, wTp, b_scaled)
    else:
        kernel = functools.partial(kern_nobias, lr_mul=lr)
        in_specs = [x_spec, w_spec]
        operands = (xp, wTp)

    y = pl.pallas_call(
        kernel,
        out_shape=jax.ShapeDtypeStruct((batch, out_dim), jnp.float32),
        grid_spec=pltpu.PrefetchScalarGridSpec(
            num_scalar_prefetch=0,
            grid=grid,
            in_specs=in_specs,
            out_specs=o_spec),
        compiler_params=compiler_params,
        cost_estimate=cost,
    )(*operands)

    if y.dtype != out_dtype:
        y = y.astype(out_dtype)
    return y.reshape(*lead, out_dim)


# --------------------------------- tests ----------------------------------- #

if __name__ == "__main__":
    key = jax.random.PRNGKey(0)
    ks = jax.random.split(key, 10)
    lr_mul = 0.1
    # Tolerance accounts for MXU vs XLA-HIGHEST f32 accumulation differences.
    ATOL, RTOL = 2e-2, 2e-2

    # Case A: StyleGAN-typical mapping FC, bias, extra leading batch dim.
    xa = jax.random.normal(ks[0], (2, 128, 512), dtype=jnp.float32)
    wa = jax.random.normal(ks[1], (512, 512), dtype=jnp.float32)
    ba = 0.01 * jax.random.normal(ks[2], (512,), dtype=jnp.float32)
    out_a = jax.block_until_ready(eq_linear(xa, wa, ba, lr_mul=lr_mul))
    ref_a = eq_linear_ref(xa, wa, ba, lr_mul=lr_mul)
    assert out_a.shape == (2, 128, 512)
    assert jnp.allclose(out_a, ref_a, atol=ATOL, rtol=RTOL), "case A mismatch"

    # Case B: non-128-aligned batch/out_dim, no bias -> ragged-edge (no-pad) path.
    xb = jax.random.normal(ks[3], (200, 384), dtype=jnp.float32)
    wb = jax.random.normal(ks[4], (320, 384), dtype=jnp.float32)
    out_b = jax.block_until_ready(eq_linear(xb, wb, None, lr_mul=lr_mul))
    ref_b = eq_linear_ref(xb, wb, None, lr_mul=lr_mul)
    assert out_b.shape == (200, 320)
    assert jnp.allclose(out_b, ref_b, atol=ATOL, rtol=RTOL), "case B mismatch"

    # Case C: large in_dim -> K-tiled grid, resident f32 output accumulation.
    xc = jax.random.normal(ks[5], (128, 2048), dtype=jnp.float32)
    wc = jax.random.normal(ks[6], (256, 2048), dtype=jnp.float32)
    bc = 0.01 * jax.random.normal(ks[7], (256,), dtype=jnp.float32)
    out_c = jax.block_until_ready(eq_linear(xc, wc, bc, lr_mul=lr_mul))
    ref_c = eq_linear_ref(xc, wc, bc, lr_mul=lr_mul)
    assert out_c.shape == (128, 256)
    # Looser bound: covers worst-case MXU f32 lowering at K=2048.
    assert jnp.allclose(out_c, ref_c, atol=1e-1, rtol=5e-2), "case C mismatch"

    # Case D: optional bf16 operand cast (f32 accumulate) -> documented numerics change.
    out_d = jax.block_until_ready(
        eq_linear(xa, wa, ba, lr_mul=lr_mul, compute_dtype=jnp.bfloat16))
    assert out_d.shape == (2, 128, 512)
    assert jnp.allclose(out_d, ref_a, atol=1e-1, rtol=5e-2), "case D mismatch"

    # Case E: tiny problem -> XLA-dot fallback path.
    xe = jax.random.normal(ks[8], (8, 32), dtype=jnp.float32)
    we = jax.random.normal(ks[9], (48, 32), dtype=jnp.float32)
    be = jnp.zeros((48,), dtype=jnp.float32)
    out_e = jax.block_until_ready(eq_linear(xe, we, be, lr_mul=lr_mul))
    ref_e = eq_linear_ref(xe, we, be, lr_mul=lr_mul)
    assert out_e.shape == (8, 48)
    assert jnp.allclose(out_e, ref_e, atol=1e-5, rtol=1e-5), "case E mismatch"

    print("KERNEL_OK")
</pallas_src>

<mosaic_0001>
module attributes {stable_mosaic.version = 11 : i64} {
  func.func @_eq_kernel_1pass_bias(%arg0: i32, %arg1: i32, %arg2: memref<256x512xf32, #tpu.memory_space<vmem>>, %arg3: memref<512x256xf32, #tpu.memory_space<vmem>>, %arg4: memref<1x256xf32, #tpu.memory_space<vmem>>, %arg5: memref<256x256xf32, #tpu.memory_space<vmem>>) attributes {dimension_semantics = [#tpu.dimension_semantics<parallel>, #tpu.dimension_semantics<parallel>], iteration_bounds = array<i64: 1, 2>, scalar_prefetch = 0 : i64, scratch_operands = 0 : i64, tpu.core_type = #tpu.core_type<tc>, window_params = [{transform_indices = @transform_0, window_bounds = array<i64: 256, 512>}, {transform_indices = @transform_1, window_bounds = array<i64: 512, 256>}, {transform_indices = @transform_2, window_bounds = array<i64: 1, 256>}, {transform_indices = @transform_3, window_bounds = array<i64: 256, 256>}]} {
    %c0 = arith.constant 0 : index
    %c0_0 = arith.constant 0 : index
    %0 = vector.load %arg2[%c0, %c0_0] : memref<256x512xf32, #tpu.memory_space<vmem>>, vector<256x512xf32>
    %c0_1 = arith.constant 0 : index
    %c0_2 = arith.constant 0 : index
    %1 = vector.load %arg3[%c0_1, %c0_2] : memref<512x256xf32, #tpu.memory_space<vmem>>, vector<512x256xf32>
    %cst = arith.constant dense<0.000000e+00> : vector<256x256xf32>
    %2 = tpu.matmul %0, %1, %cst {dimension_numbers = #tpu.dot_dimension_numbers<[1], [0], [0], [1], [0, 0, 1, 1], [], []>} : vector<256x512xf32>, vector<512x256xf32>, vector<256x256xf32> -> vector<256x256xf32>
    %cst_3 = arith.constant 1.000000e-01 : f32
    %3 = vector.broadcast %cst_3 : f32 to vector<256x256xf32>
    %4 = arith.mulf %2, %3 : vector<256x256xf32>
    %c0_4 = arith.constant 0 : index
    %c0_5 = arith.constant 0 : index
    %5 = vector.load %arg4[%c0_4, %c0_5] : memref<1x256xf32, #tpu.memory_space<vmem>>, vector<1x256xf32>
    %6 = vector.broadcast %5 : vector<1x256xf32> to vector<256x256xf32>
    %7 = arith.addf %4, %6 : vector<256x256xf32>
    %c0_6 = arith.constant 0 : index
    %c0_7 = arith.constant 0 : index
    %8 = vector.load %arg5[%c0_6, %c0_7] : memref<256x256xf32, #tpu.memory_space<vmem>>, vector<256x256xf32>
    tpu.vector_store %arg5[%c0_6, %c0_7], %7 {strides = array<i32>} : memref<256x256xf32, #tpu.memory_space<vmem>>, vector<256x256xf32>,
    return
  }
  func.func @transform_0(%arg0: i32, %arg1: i32) -> (i32, i32) {
    %c0_i32 = arith.constant 0 : i32
    %c0_i32_0 = arith.constant 0 : i32
    return %arg0, %c0_i32 : i32, i32
  }
  func.func @transform_1(%arg0: i32, %arg1: i32) -> (i32, i32) {
    %c0_i32 = arith.constant 0 : i32
    %c0_i32_0 = arith.constant 0 : i32
    return %c0_i32, %arg1 : i32, i32
  }
  func.func @transform_2(%arg0: i32, %arg1: i32) -> (i32, i32) {
    %c0_i32 = arith.constant 0 : i32
    %c0_i32_0 = arith.constant 0 : i32
    return %c0_i32, %arg1 : i32, i32
  }
  func.func @transform_3(%arg0: i32, %arg1: i32) -> (i32, i32) {
    %c0_i32 = arith.constant 0 : i32
    return %arg0, %arg1 : i32, i32
  }
}

</mosaic_0001>

<llo_original>
// kernel: tpu_custom_call.1
$region0: #{tpu_custom_call.1}
  #allocation0 [shape = 'u32[]', space=smem, size = 0x4, offset = 0x4, fixed_abs, tag = 'smem constant byte address 0x4 - core index']
  #allocation1 [shape = 'u32[144,128]{1,0:T(1,128)}', space=vmem, size = 0x12000, scoped, tag = 'internal scratch']
  %s0 = inlined_call_operand.hbm [shape: f32[256,512], index: 0, kind: input, shape index: {}]
  %s1 = inlined_call_operand.hbm [shape: f32[512,512], index: 1, kind: input, shape index: {}]
  %s2 = inlined_call_operand.vmem [shape: f32[1,512], index: 2, kind: input, shape index: {}]
  %s3 = inlined_call_operand.hbm [shape: f32[256,512], index: 3, kind: output, shape index: {}]
  %s4 = sld [smem:[#allocation0]]
  $region53: #{tpu_custom_call.1} parent=0
    _
  %s6 = ssub.s32 1, %s4
  %s7 = scalar_select 0, %s6, %s4
  $region1: #{tpu_custom_call.1} parent=0
    #allocation2 [shape = 'u8[524288]{0}', space=vmem, size = 0x80000, scoped, tag = 'input window, operand 0, single buffered']
    #allocation3 [shape = 's32[2]{0}', space=sflag, size = 0x8, scoped, tag = 'scoped memory for tpu_custom_call.1']
    #allocation4 [shape = 's32[2]{0}', space=sflag, size = 0x8, scoped, tag = 'scoped memory for tpu_custom_call.1']
    #allocation5 [shape = 'u8[1048576]{0}', space=vmem, size = 0x100000, scoped, tag = 'input window, operand 1']
    #allocation6 [shape = 's32[2]{0}', space=sflag, size = 0x8, scoped, tag = 'scoped memory for tpu_custom_call.1']
    #allocation7 [shape = 'u8[524288]{0}', space=vmem, size = 0x80000, scoped, tag = 'output window, operand 0']
    %8 = vsyncpa [#allocation3], 0
    %9 = vsyncpa [#allocation6], 0
    %s10 = scalar_lea.sflag [#allocation6], 1
    %11 = vsyncpa %s10, 0
    %12 = vsyncpa [#allocation4], 0
    %s13 = scalar_lea.sflag [#allocation4], 1
    %14 = vsyncpa %s13, 0
    loop: start=0, step=1, limit=4
    $region2: #{tpu_custom_call.1} parent=1 // loop_pre_header
      _
    $region3: #{tpu_custom_call.1} parent=1 // loop_header
      %s16 = sphi 0, %s20
      %p17 = scmp.ge.s32.totalorder %s16, 4
      %s23 = sphi 0, %s35
      %s24 = sphi 0, %s31
      %s25 = sphi 0, %s23
      %s26 = sphi 0, %s24
      %s27 = sphi 0, %s25
      %s28 = sphi 0, %s26
      %s38 = sphi 0, %s40
      %s41 = sphi 0, %s38
      %s42 = sphi 0, %s41
      %s58 = sphi 0, %s42
      %s64 = sphi 0, %s66
      %s67 = sphi 0, %s64
      %s68 = sphi 0, %s67
      %s84 = sphi 0, %s68
      %s90 = sphi 0, %s92
      %s93 = sphi 0, %s90
      %s94 = sphi 0, %s93
      %s110 = sphi 0, %s94
      %s118 = sphi 0, %s120
      %s121 = sphi 0, %s118
      %s122 = sphi 0, %s121
      %s138 = sphi 0, %s122
    $region4: #{tpu_custom_call.1} parent=1 // loop_header_branch
      %19 = sbr.rel (%p17) target = $region8
    $region5: #{tpu_custom_call.1} parent=1 // loop_body
      %s21 = ssub.s32 %s16, 1
      %s22 = ssub.s32 %s16, 2
      %s29 = sadd.s32 1, %s24
      %p30 = scmp.ge.s32.totalorder %s29, 2
      %s31 = scalar_select %p30, 0, %s29
      %s32 = sadd.s32 1, %s23
      %s33 = scalar_select %p30, %s32, %s23
      %p34 = scmp.ge.s32.totalorder %s33, 1
      %s35 = scalar_select %p34, 0, %s33
      %s36 = ssub.s32 %s23, %s35
      %p37 = scmp.eq.s32.totalorder %s36, 0
      %s39 = sadd.s32 %s38, 1
      %s40 = scalar_select %p37, %s38, %s39
      %p43 = pneg %p37
      %p44 = scmp.eq.s32.totalorder %s16, 1
      %p45 = por %p43, %p44
      %p46 = scmp.ne.s32.totalorder %s38, %s41
      %p47 = scmp.eq.s32.totalorder %s16, 0
      %p48 = por %p46, %p47
      %p49 = scmp.ne.s32.totalorder %s38, %s41
      %p50 = scmp.eq.s32.totalorder %s21, 1
      %p51 = por %p49, %p50
      %p52 = scmp.ne.s32.totalorder %s41, %s42
      %p53 = scmp.eq.s32.totalorder %s21, 0
      %p54 = por %p52, %p53
      %p55 = scmp.ne.s32.totalorder %s41, %s42
      %p56 = scmp.eq.s32.totalorder %s22, 1
      %p57 = por %p55, %p56
      %p59 = scmp.ne.s32.totalorder %s42, %s58
      %p60 = scmp.eq.s32.totalorder %s22, 0
      %p61 = por %p59, %p60
      %s62 = ssub.s32 %s24, %s31
      %p63 = scmp.eq.s32.totalorder %s62, 0
      %s65 = sadd.s32 %s64, 1
      %s66 = scalar_select %p63, %s64, %s65
      %p69 = pneg %p63
      %p70 = scmp.eq.s32.totalorder %s16, 1
      %p71 = por %p69, %p70
      %p72 = scmp.ne.s32.totalorder %s64, %s67
      %p73 = scmp.eq.s32.totalorder %s16, 0
      %p74 = por %p72, %p73
      %p75 = scmp.ne.s32.totalorder %s64, %s67
      %p76 = scmp.eq.s32.totalorder %s21, 1
      %p77 = por %p75, %p76
      %p78 = scmp.ne.s32.totalorder %s67, %s68
      %p79 = scmp.eq.s32.totalorder %s21, 0
      %p80 = por %p78, %p79
      %p81 = scmp.ne.s32.totalorder %s67, %s68
      %p82 = scmp.eq.s32.totalorder %s22, 1
      %p83 = por %p81, %p82
      %p85 = scmp.ne.s32.totalorder %s68, %s84
      %p86 = scmp.eq.s32.totalorder %s22, 0
      %p87 = por %p85, %p86
      %s88 = ssub.s32 %s24, %s31
      %p89 = scmp.eq.s32.totalorder %s88, 0
      %s91 = sadd.s32 %s90, 1
      %s92 = scalar_select %p89, %s90, %s91
      %p95 = pneg %p89
      %p96 = scmp.eq.s32.totalorder %s16, 1
      %p97 = por %p95, %p96
      %p98 = scmp.ne.s32.totalorder %s90, %s93
      %p99 = scmp.eq.s32.totalorder %s16, 0
      %p100 = por %p98, %p99
      %p101 = scmp.ne.s32.totalorder %s90, %s93
      %p102 = scmp.eq.s32.totalorder %s21, 1
      %p103 = por %p101, %p102
      %p104 = scmp.ne.s32.totalorder %s93, %s94
      %p105 = scmp.eq.s32.totalorder %s21, 0
      %p106 = por %p104, %p105
      %p107 = scmp.ne.s32.totalorder %s93, %s94
      %p108 = scmp.eq.s32.totalorder %s22, 1
      %p109 = por %p107, %p108
      %p111 = scmp.ne.s32.totalorder %s94, %s110
      %p112 = scmp.eq.s32.totalorder %s22, 0
      %p113 = por %p111, %p112
      %s114 = ssub.s32 %s23, %s35
      %s115 = ssub.s32 %s24, %s31
      %s116 = sor.u32 %s114, %s115
      %p117 = scmp.eq.s32.totalorder %s116, 0
      %s119 = sadd.s32 %s118, 1
      %s120 = scalar_select %p117, %s118, %s119
      %p123 = pneg %p117
      %p124 = scmp.eq.s32.totalorder %s16, 1
      %p125 = por %p123, %p124
      %p126 = scmp.ne.s32.totalorder %s118, %s121
      %p127 = scmp.eq.s32.totalorder %s16, 0
      %p128 = por %p126, %p127
      %p129 = scmp.ne.s32.totalorder %s118, %s121
      %p130 = scmp.eq.s32.totalorder %s21, 1
      %p131 = por %p129, %p130
      %p132 = scmp.ne.s32.totalorder %s121, %s122
      %p133 = scmp.eq.s32.totalorder %s21, 0
      %p134 = por %p132, %p133
      %p135 = scmp.ne.s32.totalorder %s121, %s122
      %p136 = scmp.eq.s32.totalorder %s22, 1
      %p137 = por %p135, %p136
      %p139 = scmp.ne.s32.totalorder %s122, %s138
      %p140 = scmp.eq.s32.totalorder %s22, 0
      %p141 = por %p139, %p140
      %p142 = scmp.le.s32.totalorder 1, %s16
      %p143 = scmp.lt.s32.totalorder %s16, 3
      %p144 = pnand %p142, %p143
      %p145 = pneg %p144
      // Predicated region
      $region9: #{tpu_custom_call.1} parent=5 // pred_check
        _
      $region10: #{tpu_custom_call.1} parent=5 // pred_check_branch
        %147 = sbr.rel (%p144) target = $region12
      $region11: #{tpu_custom_call.1} parent=5 // pred_region
        %s148 = ssub.s32 %s16, 1
        // Predicated region
        $region13: #{tpu_custom_call.1} parent=11 // pred_check
          %p149 = pneg %p54
        $region14: #{tpu_custom_call.1} parent=11 // pred_check_branch
          %151 = sbr.rel (%p149) target = $region16
        $region15: #{tpu_custom_call.1} parent=11 // pred_region
          %s152 = smul.u32 32, %s25
          %s154 = ssub.s32 16384, 16384
          %155 = vsyncadd [#allocation3], %s154
          %s156 = smul.addr %s152, 4
          %s157 = smul.addr %s156, 128
          %s158 = scalar_lea.hbm %s0, %s157
          %s159 = sshll.u32 [#allocation2], 4
          %s160 = int_to_ptr.vmem [resolvable:$true] %s159
          %165 = dma.hbm_to_vmem [thread:$0]  %s158, 16384, %s160, [#allocation3], 512, 512, 32
        $region16: #{tpu_custom_call.1} parent=11 // pred_fallthru
          _
      $region12: #{tpu_custom_call.1} parent=5 // pred_fallthru
        _
      %p166 = scmp.lt.s32.totalorder %s16, 2
      // Predicated region
      $region17: #{tpu_custom_call.1} parent=5 // pred_check
        %p167 = pneg %p166
      $region18: #{tpu_custom_call.1} parent=5 // pred_check_branch
        %169 = sbr.rel (%p167) target = $region20
      $region19: #{tpu_custom_call.1} parent=5 // pred_region
        // Predicated region
        $region21: #{tpu_custom_call.1} parent=19 // pred_check
          %p170 = pneg %p74
        $region22: #{tpu_custom_call.1} parent=19 // pred_check_branch
          %172 = sbr.rel (%p170) target = $region24
        $region23: #{tpu_custom_call.1} parent=19 // pred_region
          %s173 = sand.u32 %s64, 1
          %s174 = scalar_lea.sflag [#allocation6], %s173
          %s175 = sand.u32 %s64, 1
          %s176 = smul.addr %s175, 1024
          %s177 = scalar_lea.vmem [#allocation5], %s176
          %s178 = smul.u32 2, %s24
          %s180 = ssub.s32 16384, 16384
          %181 = vsyncadd %s174, %s180
          %s182 = smul.addr %s178, 128
          %s183 = scalar_lea.hbm %s1, %s182
          %s184 = sshll.u32 %s177, 4
          %s185 = int_to_ptr.vmem [resolvable:$true] %s184
          %190 = dma.hbm_to_vmem [thread:$0]  %s183, 16384, %s185, %s174, 512, 256, 16
        $region24: #{tpu_custom_call.1} parent=19 // pred_fallthru
          _
        // Predicated region
        $region25: #{tpu_custom_call.1} parent=19 // pred_check
          %p191 = pneg %p100
        $region26: #{tpu_custom_call.1} parent=19 // pred_check_branch
          %193 = sbr.rel (%p191) target = $region28
        $region27: #{tpu_custom_call.1} parent=19 // pred_region
          %s194 = smul.u32 2, %s24
          %p195 = scmp.lt.s32.totalorder %s194, 3
          %s196 = scalar_select %p195, %s194, 3
          %s197 = scalar_lea.vmem %s2, %s196
          %s198 = smul.u32 2, %s24
        $region28: #{tpu_custom_call.1} parent=19 // pred_fallthru
          _
      $region20: #{tpu_custom_call.1} parent=5 // pred_fallthru
        _
      %p199 = scmp.le.s32.totalorder 1, %s16
      %p200 = scmp.lt.s32.totalorder %s16, 3
      %p201 = pnand %p199, %p200
      %p202 = pneg %p201
      // Predicated region
      $region29: #{tpu_custom_call.1} parent=5 // pred_check
        _
      $region30: #{tpu_custom_call.1} parent=5 // pred_check_branch
        %204 = sbr.rel (%p201) target = $region32
      $region31: #{tpu_custom_call.1} parent=5 // pred_region
        %s205 = ssub.s32 %s16, 1
        // Predicated region
        $region33: #{tpu_custom_call.1} parent=31 // pred_check
          %p206 = pneg %p54
        $region34: #{tpu_custom_call.1} parent=31 // pred_check_branch
          %208 = sbr.rel (%p206) target = $region36
        $region35: #{tpu_custom_call.1} parent=31 // pred_region
          %209 = dma.done [#allocation3], 16384
        $region36: #{tpu_custom_call.1} parent=31 // pred_fallthru
          _
        %s210 = sand.u32 %s67, 1
        %s211 = scalar_lea.sflag [#allocation6], %s210
        %s212 = sand.u32 %s67, 1
        %s213 = smul.addr %s212, 1024
        %s214 = scalar_lea.vmem [#allocation5], %s213
        // Predicated region
        $region37: #{tpu_custom_call.1} parent=31 // pred_check
          %p215 = pneg %p80
        $region38: #{tpu_custom_call.1} parent=31 // pred_check_branch
          %217 = sbr.rel (%p215) target = $region40
        $region39: #{tpu_custom_call.1} parent=31 // pred_region
          %218 = dma.done %s211, 16384
        $region40: #{tpu_custom_call.1} parent=31 // pred_fallthru
          _
        %p219 = pneg %p54
        %p220 = pneg %p51
        %s221 = sand.u32 %s67, 1
        %s222 = scalar_lea.sflag [#allocation6], %s221
        %s223 = sand.u32 %s67, 1
        %s224 = smul.addr %s223, 1024
        %s225 = scalar_lea.vmem [#allocation5], %s224
        %p226 = pneg %p80
        %p227 = pneg %p77
        %s228 = smul.u32 2, %s26
        %p229 = scmp.lt.s32.totalorder %s228, 3
        %s230 = scalar_select %p229, %s228, 3
        %s231 = scalar_lea.vmem %s2, %s230
        %p232 = pneg %p106
        %p233 = pneg %p103
        %p234 = pneg %p134
        %p235 = pneg %p131
        %s236 = sand.u32 %s121, 1
        %s237 = scalar_lea.sflag [#allocation4], %s236
        %s238 = sand.u32 %s121, 1
        %s239 = smul.addr %s238, 512
        %s240 = scalar_lea.vmem [#allocation7], %s239
        %s241 = smul.u32 32, %s25
        %s242 = smul.u32 2, %s26
        %s243 = smul.u32 2, %s26
        %p244 = scmp.lt.s32.totalorder %s243, 3
        %s245 = scalar_select %p244, %s243, 3
        %s246 = scalar_lea.vmem %s2, %s245
        %s247 = smul.u32 2, %s26
        %s248 = smul.u32 32, %s25
        %s249 = smul.u32 2, %s26
        %v250 = vld [vmem:[#allocation2] sm:$0xff]
        %v251 = vld [vmem:[#allocation2 + $0x8] sm:$0xff]
        %v252 = vld [vmem:[#allocation2 + $0x10] sm:$0xff]
        %v253 = vld [vmem:[#allocation2 + $0x18] sm:$0xff]
        %v254 = vld [vmem:[#allocation2 + $0x20] sm:$0xff]
        %v255 = vld [vmem:[#allocation2 + $0x28] sm:$0xff]
        %v256 = vld [vmem:[#allocation2 + $0x30] sm:$0xff]
        %v257 = vld [vmem:[#allocation2 + $0x38] sm:$0xff]
        %v258 = vld [vmem:[#allocation2 + $0x40] sm:$0xff]
        %v259 = vld [vmem:[#allocation2 + $0x48] sm:$0xff]
        %v260 = vld [vmem:[#allocation2 + $0x50] sm:$0xff]
        %v261 = vld [vmem:[#allocation2 + $0x58] sm:$0xff]
        %v262 = vld [vmem:[#allocation2 + $0x60] sm:$0xff]
        %v263 = vld [vmem:[#allocation2 + $0x68] sm:$0xff]
        %v264 = vld [vmem:[#allocation2 + $0x70] sm:$0xff]
        %v265 = vld [vmem:[#allocation2 + $0x78] sm:$0xff]
        %v266 = vld [vmem:[#allocation2 + $0x80] sm:$0xff]
        %v267 = vld [vmem:[#allocation2 + $0x88] sm:$0xff]
        %v268 = vld [vmem:[#allocation2 + $0x90] sm:$0xff]
        %v269 = vld [vmem:[#allocation2 + $0x98] sm:$0xff]
        %v270 = vld [vmem:[#allocation2 + $0xa0] sm:$0xff]
        %v271 = vld [vmem:[#allocation2 + $0xa8] sm:$0xff]
        %v272 = vld [vmem:[#allocation2 + $0xb0] sm:$0xff]
        %v273 = vld [vmem:[#allocation2 + $0xb8] sm:$0xff]
        %v274 = vld [vmem:[#allocation2 + $0xc0] sm:$0xff]
        %v275 = vld [vmem:[#allocation2 + $0xc8] sm:$0xff]
        %v276 = vld [vmem:[#allocation2 + $0xd0] sm:$0xff]
        %v277 = vld [vmem:[#allocation2 + $0xd8] sm:$0xff]
        %v278 = vld [vmem:[#allocation2 + $0xe0] sm:$0xff]
        %v279 = vld [vmem:[#allocation2 + $0xe8] sm:$0xff]
        %v280 = vld [vmem:[#allocation2 + $0xf0] sm:$0xff]
        %v281 = vld [vmem:[#allocation2 + $0xf8] sm:$0xff]
        %v282 = vld [vmem:[#allocation2 + $0x100] sm:$0xff]
        %v283 = vld [vmem:[#allocation2 + $0x108] sm:$0xff]
        %v284 = vld [vmem:[#allocation2 + $0x110] sm:$0xff]
        %v285 = vld [vmem:[#allocation2 + $0x118] sm:$0xff]
        %v286 = vld [vmem:[#allocation2 + $0x120] sm:$0xff]
        %v287 = vld [vmem:[#allocation2 + $0x128] sm:$0xff]
        %v288 = vld [vmem:[#allocation2 + $0x130] sm:$0xff]
        %v289 = vld [vmem:[#allocation2 + $0x138] sm:$0xff]
        %v290 = vld [vmem:[#allocation2 + $0x140] sm:$0xff]
        %v291 = vld [vmem:[#allocation2 + $0x148] sm:$0xff]
        %v292 = vld [vmem:[#allocation2 + $0x150] sm:$0xff]
        %v293 = vld [vmem:[#allocation2 + $0x158] sm:$0xff]
        %v294 = vld [vmem:[#allocation2 + $0x160] sm:$0xff]
        %v295 = vld [vmem:[#allocation2 + $0x168] sm:$0xff]
        %v296 = vld [vmem:[#allocation2 + $0x170] sm:$0xff]
        %v297 = vld [vmem:[#allocation2 + $0x178] sm:$0xff]
        %v298 = vld [vmem:[#allocation2 + $0x180] sm:$0xff]
        %v299 = vld [vmem:[#allocation2 + $0x188] sm:$0xff]
        %v300 = vld [vmem:[#allocation2 + $0x190] sm:$0xff]
        %v301 = vld [vmem:[#allocation2 + $0x198] sm:$0xff]
        %v302 = vld [vmem:[#allocation2 + $0x1a0] sm:$0xff]
        %v303 = vld [vmem:[#allocation2 + $0x1a8] sm:$0xff]
        %v304 = vld [vmem:[#allocation2 + $0x1b0] sm:$0xff]
        %v305 = vld [vmem:[#allocation2 + $0x1b8] sm:$0xff]
        %v306 = vld [vmem:[#allocation2 + $0x1c0] sm:$0xff]
        %v307 = vld [vmem:[#allocation2 + $0x1c8] sm:$0xff]
        %v308 = vld [vmem:[#allocation2 + $0x1d0] sm:$0xff]
        %v309 = vld [vmem:[#allocation2 + $0x1d8] sm:$0xff]
        %v310 = vld [vmem:[#allocation2 + $0x1e0] sm:$0xff]
        %v311 = vld [vmem:[#allocation2 + $0x1e8] sm:$0xff]
        %v312 = vld [vmem:[#allocation2 + $0x1f0] sm:$0xff]
        %v313 = vld [vmem:[#allocation2 + $0x1f8] sm:$0xff]
        %v314 = vld [vmem:[#allocation2 + $0x200] sm:$0xff]
        %v315 = vld [vmem:[#allocation2 + $0x208] sm:$0xff]
        %v316 = vld [vmem:[#allocation2 + $0x210] sm:$0xff]
        %v317 = vld [vmem:[#allocation2 + $0x218] sm:$0xff]
        %v318 = vld [vmem:[#allocation2 + $0x220] sm:$0xff]
        %v319 = vld [vmem:[#allocation2 + $0x228] sm:$0xff]
        %v320 = vld [vmem:[#allocation2 + $0x230] sm:$0xff]
        %v321 = vld [vmem:[#allocation2 + $0x238] sm:$0xff]
        %v322 = vld [vmem:[#allocation2 + $0x240] sm:$0xff]
        %v323 = vld [vmem:[#allocation2 + $0x248] sm:$0xff]
        %v324 = vld [vmem:[#allocation2 + $0x250] sm:$0xff]
        %v325 = vld [vmem:[#allocation2 + $0x258] sm:$0xff]
        %v326 = vld [vmem:[#allocation2 + $0x260] sm:$0xff]
        %v327 = vld [vmem:[#allocation2 + $0x268] sm:$0xff]
        %v328 = vld [vmem:[#allocation2 + $0x270] sm:$0xff]
        %v329 = vld [vmem:[#allocation2 + $0x278] sm:$0xff]
        %v330 = vld [vmem:[#allocation2 + $0x280] sm:$0xff]
        %v331 = vld [vmem:[#allocation2 + $0x288] sm:$0xff]
        %v332 = vld [vmem:[#allocation2 + $0x290] sm:$0xff]
        %v333 = vld [vmem:[#allocation2 + $0x298] sm:$0xff]
        %v334 = vld [vmem:[#allocation2 + $0x2a0] sm:$0xff]
        %v335 = vld [vmem:[#allocation2 + $0x2a8] sm:$0xff]
        %v336 = vld [vmem:[#allocation2 + $0x2b0] sm:$0xff]
        %v337 = vld [vmem:[#allocation2 + $0x2b8] sm:$0xff]
        %v338 = vld [vmem:[#allocation2 + $0x2c0] sm:$0xff]
        %v339 = vld [vmem:[#allocation2 + $0x2c8] sm:$0xff]
        %v340 = vld [vmem:[#allocation2 + $0x2d0] sm:$0xff]
        %v341 = vld [vmem:[#allocation2 + $0x2d8] sm:$0xff]
        %v342 = vld [vmem:[#allocation2 + $0x2e0] sm:$0xff]
        %v343 = vld [vmem:[#allocation2 + $0x2e8] sm:$0xff]
        %v344 = vld [vmem:[#allocation2 + $0x2f0] sm:$0xff]
        %v345 = vld [vmem:[#allocation2 + $0x2f8] sm:$0xff]
        %v346 = vld [vmem:[#allocation2 + $0x300] sm:$0xff]
        %v347 = vld [vmem:[#allocation2 + $0x308] sm:$0xff]
        %v348 = vld [vmem:[#allocation2 + $0x310] sm:$0xff]
        %v349 = vld [vmem:[#allocation2 + $0x318] sm:$0xff]
        %v350 = vld [vmem:[#allocation2 + $0x320] sm:$0xff]
        %v351 = vld [vmem:[#allocation2 + $0x328] sm:$0xff]
        %v352 = vld [vmem:[#allocation2 + $0x330] sm:$0xff]
        %v353 = vld [vmem:[#allocation2 + $0x338] sm:$0xff]
        %v354 = vld [vmem:[#allocation2 + $0x340] sm:$0xff]
        %v355 = vld [vmem:[#allocation2 + $0x348] sm:$0xff]
        %v356 = vld [vmem:[#allocation2 + $0x350] sm:$0xff]
        %v357 = vld [vmem:[#allocation2 + $0x358] sm:$0xff]
        %v358 = vld [vmem:[#allocation2 + $0x360] sm:$0xff]
        %v359 = vld [vmem:[#allocation2 + $0x368] sm:$0xff]
        %v360 = vld [vmem:[#allocation2 + $0x370] sm:$0xff]
        %v361 = vld [vmem:[#allocation2 + $0x378] sm:$0xff]
        %v362 = vld [vmem:[#allocation2 + $0x380] sm:$0xff]
        %v363 = vld [vmem:[#allocation2 + $0x388] sm:$0xff]
        %v364 = vld [vmem:[#allocation2 + $0x390] sm:$0xff]
        %v365 = vld [vmem:[#allocation2 + $0x398] sm:$0xff]
        %v366 = vld [vmem:[#allocation2 + $0x3a0] sm:$0xff]
        %v367 = vld [vmem:[#allocation2 + $0x3a8] sm:$0xff]
        %v368 = vld [vmem:[#allocation2 + $0x3b0] sm:$0xff]
        %v369 = vld [vmem:[#allocation2 + $0x3b8] sm:$0xff]
        %v370 = vld [vmem:[#allocation2 + $0x3c0] sm:$0xff]
        %v371 = vld [vmem:[#allocation2 + $0x3c8] sm:$0xff]
        %v372 = vld [vmem:[#allocation2 + $0x3d0] sm:$0xff]
        %v373 = vld [vmem:[#allocation2 + $0x3d8] sm:$0xff]
        %v374 = vld [vmem:[#allocation2 + $0x3e0] sm:$0xff]
        %v375 = vld [vmem:[#allocation2 + $0x3e8] sm:$0xff]
        %v376 = vld [vmem:[#allocation2 + $0x3f0] sm:$0xff]
        %v377 = vld [vmem:[#allocation2 + $0x3f8] sm:$0xff]
        %v378 = vld [vmem:[%s214] sm:$0xff]
        %v379 = vld [vmem:[%s214 + $0x8] sm:$0xff]
        %v380 = vld [vmem:[%s214 + $0x10] sm:$0xff]
        %v381 = vld [vmem:[%s214 + $0x18] sm:$0xff]
        %v382 = vld [vmem:[%s214 + $0x20] sm:$0xff]
        %v383 = vld [vmem:[%s214 + $0x28] sm:$0xff]
        %v384 = vld [vmem:[%s214 + $0x30] sm:$0xff]
        %v385 = vld [vmem:[%s214 + $0x38] sm:$0xff]
        %v386 = vld [vmem:[%s214 + $0x40] sm:$0xff]
        %v387 = vld [vmem:[%s214 + $0x48] sm:$0xff]
        %v388 = vld [vmem:[%s214 + $0x50] sm:$0xff]
        %v389 = vld [vmem:[%s214 + $0x58] sm:$0xff]
        %v390 = vld [vmem:[%s214 + $0x60] sm:$0xff]
        %v391 = vld [vmem:[%s214 + $0x68] sm:$0xff]
        %v392 = vld [vmem:[%s214 + $0x70] sm:$0xff]
        %v393 = vld [vmem:[%s214 + $0x78] sm:$0xff]
        %v394 = vld [vmem:[%s214 + $0x80] sm:$0xff]
        %v395 = vld [vmem:[%s214 + $0x88] sm:$0xff]
        %v396 = vld [vmem:[%s214 + $0x90] sm:$0xff]
        %v397 = vld [vmem:[%s214 + $0x98] sm:$0xff]
        %v398 = vld [vmem:[%s214 + $0xa0] sm:$0xff]
        %v399 = vld [vmem:[%s214 + $0xa8] sm:$0xff]
        %v400 = vld [vmem:[%s214 + $0xb0] sm:$0xff]
        %v401 = vld [vmem:[%s214 + $0xb8] sm:$0xff]
        %v402 = vld [vmem:[%s214 + $0xc0] sm:$0xff]
        %v403 = vld [vmem:[%s214 + $0xc8] sm:$0xff]
        %v404 = vld [vmem:[%s214 + $0xd0] sm:$0xff]
        %v405 = vld [vmem:[%s214 + $0xd8] sm:$0xff]
        %v406 = vld [vmem:[%s214 + $0xe0] sm:$0xff]
        %v407 = vld [vmem:[%s214 + $0xe8] sm:$0xff]
        %v408 = vld [vmem:[%s214 + $0xf0] sm:$0xff]
        %v409 = vld [vmem:[%s214 + $0xf8] sm:$0xff]
        %v410 = vld [vmem:[%s214 + $0x100] sm:$0xff]
        %v411 = vld [vmem:[%s214 + $0x108] sm:$0xff]
        %v412 = vld [vmem:[%s214 + $0x110] sm:$0xff]
        %v413 = vld [vmem:[%s214 + $0x118] sm:$0xff]
        %v414 = vld [vmem:[%s214 + $0x120] sm:$0xff]
        %v415 = vld [vmem:[%s214 + $0x128] sm:$0xff]
        %v416 = vld [vmem:[%s214 + $0x130] sm:$0xff]
        %v417 = vld [vmem:[%s214 + $0x138] sm:$0xff]
        %v418 = vld [vmem:[%s214 + $0x140] sm:$0xff]
        %v419 = vld [vmem:[%s214 + $0x148] sm:$0xff]
        %v420 = vld [vmem:[%s214 + $0x150] sm:$0xff]
        %v421 = vld [vmem:[%s214 + $0x158] sm:$0xff]
        %v422 = vld [vmem:[%s214 + $0x160] sm:$0xff]
        %v423 = vld [vmem:[%s214 + $0x168] sm:$0xff]
        %v424 = vld [vmem:[%s214 + $0x170] sm:$0xff]
        %v425 = vld [vmem:[%s214 + $0x178] sm:$0xff]
        %v426 = vld [vmem:[%s214 + $0x180] sm:$0xff]
        %v427 = vld [vmem:[%s214 + $0x188] sm:$0xff]
        %v428 = vld [vmem:[%s214 + $0x190] sm:$0xff]
        %v429 = vld [vmem:[%s214 + $0x198] sm:$0xff]
        %v430 = vld [vmem:[%s214 + $0x1a0] sm:$0xff]
        %v431 = vld [vmem:[%s214 + $0x1a8] sm:$0xff]
        %v432 = vld [vmem:[%s214 + $0x1b0] sm:$0xff]
        %v433 = vld [vmem:[%s214 + $0x1b8] sm:$0xff]
        %v434 = vld [vmem:[%s214 + $0x1c0] sm:$0xff]
        %v435 = vld [vmem:[%s214 + $0x1c8] sm:$0xff]
        %v436 = vld [vmem:[%s214 + $0x1d0] sm:$0xff]
        %v437 = vld [vmem:[%s214 + $0x1d8] sm:$0xff]
        %v438 = vld [vmem:[%s214 + $0x1e0] sm:$0xff]
        %v439 = vld [vmem:[%s214 + $0x1e8] sm:$0xff]
        %v440 = vld [vmem:[%s214 + $0x1f0] sm:$0xff]
        %v441 = vld [vmem:[%s214 + $0x1f8] sm:$0xff]
        %v442 = vld [vmem:[%s214 + $0x200] sm:$0xff]
        %v443 = vld [vmem:[%s214 + $0x208] sm:$0xff]
        %v444 = vld [vmem:[%s214 + $0x210] sm:$0xff]
        %v445 = vld [vmem:[%s214 + $0x218] sm:$0xff]
        %v446 = vld [vmem:[%s214 + $0x220] sm:$0xff]
        %v447 = vld [vmem:[%s214 + $0x228] sm:$0xff]
        %v448 = vld [vmem:[%s214 + $0x230] sm:$0xff]
        %v449 = vld [vmem:[%s214 + $0x238] sm:$0xff]
        %v450 = vld [vmem:[%s214 + $0x240] sm:$0xff]
        %v451 = vld [vmem:[%s214 + $0x248] sm:$0xff]
        %v452 = vld [vmem:[%s214 + $0x250] sm:$0xff]
        %v453 = vld [vmem:[%s214 + $0x258] sm:$0xff]
        %v454 = vld [vmem:[%s214 + $0x260] sm:$0xff]
        %v455 = vld [vmem:[%s214 + $0x268] sm:$0xff]
        %v456 = vld [vmem:[%s214 + $0x270] sm:$0xff]
        %v457 = vld [vmem:[%s214 + $0x278] sm:$0xff]
        %v458 = vld [vmem:[%s214 + $0x280] sm:$0xff]
        %v459 = vld [vmem:[%s214 + $0x288] sm:$0xff]
        %v460 = vld [vmem:[%s214 + $0x290] sm:$0xff]
        %v461 = vld [vmem:[%s214 + $0x298] sm:$0xff]
        %v462 = vld [vmem:[%s214 + $0x2a0] sm:$0xff]
        %v463 = vld [vmem:[%s214 + $0x2a8] sm:$0xff]
        %v464 = vld [vmem:[%s214 + $0x2b0] sm:$0xff]
        %v465 = vld [vmem:[%s214 + $0x2b8] sm:$0xff]
        %v466 = vld [vmem:[%s214 + $0x2c0] sm:$0xff]
        %v467 = vld [vmem:[%s214 + $0x2c8] sm:$0xff]
        %v468 = vld [vmem:[%s214 + $0x2d0] sm:$0xff]
        %v469 = vld [vmem:[%s214 + $0x2d8] sm:$0xff]
        %v470 = vld [vmem:[%s214 + $0x2e0] sm:$0xff]
        %v471 = vld [vmem:[%s214 + $0x2e8] sm:$0xff]
        %v472 = vld [vmem:[%s214 + $0x2f0] sm:$0xff]
        %v473 = vld [vmem:[%s214 + $0x2f8] sm:$0xff]
        %v474 = vld [vmem:[%s214 + $0x300] sm:$0xff]
        %v475 = vld [vmem:[%s214 + $0x308] sm:$0xff]
        %v476 = vld [vmem:[%s214 + $0x310] sm:$0xff]
        %v477 = vld [vmem:[%s214 + $0x318] sm:$0xff]
        %v478 = vld [vmem:[%s214 + $0x320] sm:$0xff]
        %v479 = vld [vmem:[%s214 + $0x328] sm:$0xff]
        %v480 = vld [vmem:[%s214 + $0x330] sm:$0xff]
        %v481 = vld [vmem:[%s214 + $0x338] sm:$0xff]
        %v482 = vld [vmem:[%s214 + $0x340] sm:$0xff]
        %v483 = vld [vmem:[%s214 + $0x348] sm:$0xff]
        %v484 = vld [vmem:[%s214 + $0x350] sm:$0xff]
        %v485 = vld [vmem:[%s214 + $0x358] sm:$0xff]
        %v486 = vld [vmem:[%s214 + $0x360] sm:$0xff]
        %v487 = vld [vmem:[%s214 + $0x368] sm:$0xff]
        %v488 = vld [vmem:[%s214 + $0x370] sm:$0xff]
        %v489 = vld [vmem:[%s214 + $0x378] sm:$0xff]
        %v490 = vld [vmem:[%s214 + $0x380] sm:$0xff]
        %v491 = vld [vmem:[%s214 + $0x388] sm:$0xff]
        %v492 = vld [vmem:[%s214 + $0x390] sm:$0xff]
        %v493 = vld [vmem:[%s214 + $0x398] sm:$0xff]
        %v494 = vld [vmem:[%s214 + $0x3a0] sm:$0xff]
        %v495 = vld [vmem:[%s214 + $0x3a8] sm:$0xff]
        %v496 = vld [vmem:[%s214 + $0x3b0] sm:$0xff]
        %v497 = vld [vmem:[%s214 + $0x3b8] sm:$0xff]
        %v498 = vld [vmem:[%s214 + $0x3c0] sm:$0xff]
        %v499 = vld [vmem:[%s214 + $0x3c8] sm:$0xff]
        %v500 = vld [vmem:[%s214 + $0x3d0] sm:$0xff]
        %v501 = vld [vmem:[%s214 + $0x3d8] sm:$0xff]
        %v502 = vld [vmem:[%s214 + $0x3e0] sm:$0xff]
        %v503 = vld [vmem:[%s214 + $0x3e8] sm:$0xff]
        %v504 = vld [vmem:[%s214 + $0x3f0] sm:$0xff]
        %v505 = vld [vmem:[%s214 + $0x3f8] sm:$0xff]
        %506 = vmatprep.subr.mxu0 %v379
        %507 = vmatpush1.msra.mxu0 %v378
        %508 = vmatprep.subr.mxu0 %v381
        %509 = vmatpush1.msra.mxu0 %v380
        %510 = vmatprep.subr.mxu0 %v383
        %511 = vmatpush1.msra.mxu0 %v382
        %512 = vmatprep.subr.mxu0 %v385
        %513 = vmatpush1.msra.mxu0 %v384
        %514 = vmatprep.subr.mxu0 %v387
        %515 = vmatpush1.msra.mxu0 %v386
        %516 = vmatprep.subr.mxu0 %v389
        %517 = vmatpush1.msra.mxu0 %v388
        %518 = vmatprep.subr.mxu0 %v391
        %519 = vmatpush1.msra.mxu0 %v390
        %520 = vmatprep.subr.mxu0 %v393
        %521 = vmatpush1.msra.mxu0 %v392
        %522 = vmatprep.subr.mxu0 %v395
        %523 = vmatpush1.msra.mxu0 %v394
        %524 = vmatprep.subr.mxu0 %v397
        %525 = vmatpush1.msra.mxu0 %v396
        %526 = vmatprep.subr.mxu0 %v399
        %527 = vmatpush1.msra.mxu0 %v398
        %528 = vmatprep.subr.mxu0 %v401
        %529 = vmatpush1.msra.mxu0 %v400
        %530 = vmatprep.subr.mxu0 %v403
        %531 = vmatpush1.msra.mxu0 %v402
        %532 = vmatprep.subr.mxu0 %v405
        %533 = vmatpush1.msra.mxu0 %v404
        %534 = vmatprep.subr.mxu0 %v407
        %535 = vmatpush1.msra.mxu0 %v406
        %536 = vmatprep.subr.mxu0 %v409
        %537 = vmatpush1.msra.mxu0 %v408
        %538 = vmatprep.subr.mxu0 %v411
        %539 = vmatpush1.msra.mxu0 %v410
        %540 = vmatprep.subr.mxu0 %v413
        %541 = vmatpush1.msra.mxu0 %v412
        %542 = vmatprep.subr.mxu0 %v415
        %543 = vmatpush1.msra.mxu0 %v414
        %544 = vmatprep.subr.mxu0 %v417
        %545 = vmatpush1.msra.mxu0 %v416
        %546 = vmatprep.subr.mxu0 %v419
        %547 = vmatpush1.msra.mxu0 %v418
        %548 = vmatprep.subr.mxu0 %v421
        %549 = vmatpush1.msra.mxu0 %v420
        %550 = vmatprep.subr.mxu0 %v423
        %551 = vmatpush1.msra.mxu0 %v422
        %552 = vmatprep.subr.mxu0 %v425
        %553 = vmatpush1.msra.mxu0 %v424
        %554 = vmatprep.subr.mxu0 %v427
        %555 = vmatpush1.msra.mxu0 %v426
        %556 = vmatprep.subr.mxu0 %v429
        %557 = vmatpush1.msra.mxu0 %v428
        %558 = vmatprep.subr.mxu0 %v431
        %559 = vmatpush1.msra.mxu0 %v430
        %560 = vmatprep.subr.mxu0 %v433
        %561 = vmatpush1.msra.mxu0 %v432
        %562 = vmatprep.subr.mxu0 %v435
        %563 = vmatpush1.msra.mxu0 %v434
        %564 = vmatprep.subr.mxu0 %v437
        %565 = vmatpush1.msra.mxu0 %v436
        %566 = vmatprep.subr.mxu0 %v439
        %567 = vmatpush1.msra.mxu0 %v438
        %568 = vmatprep.subr.mxu0 %v441
        %569 = vmatpush1.msra.mxu0 %v440
        %570 = vmatprep.mubr.f32.mxu0 %v251
        %571 = vmatmul.mubr.f32.gmra.mrb[0].mxu0 %v250
        %v572 = vpop.f32.mrb[0].mxu0
        %v573 = vadd.f32 0.0, %v572
        %v574 = vpop.f32.mrb[0].mxu0
        %v575 = vadd.f32 0.0, %v574
        %576 = vmatprep.mubr.f32.mxu0 %v255
        %577 = vmatmul.mubr.f32.gmra.mrb[0].mxu0 %v254
        %v578 = vpop.f32.mrb[0].mxu0
        %v579 = vadd.f32 0.0, %v578
        %v580 = vpop.f32.mrb[0].mxu0
        %v581 = vadd.f32 0.0, %v580
        %582 = vmatprep.mubr.f32.mxu0 %v259
        %583 = vmatmul.mubr.f32.gmra.mrb[0].mxu0 %v258
        %v584 = vpop.f32.mrb[0].mxu0
        %v585 = vadd.f32 0.0, %v584
        %v586 = vpop.f32.mrb[0].mxu0
        %v587 = vadd.f32 0.0, %v586
        %588 = vmatprep.mubr.f32.mxu0 %v263
        %589 = vmatmul.mubr.f32.gmra.mrb[0].mxu0 %v262
        %v590 = vpop.f32.mrb[0].mxu0
        %v591 = vadd.f32 0.0, %v590
        %v592 = vpop.f32.mrb[0].mxu0
        %v593 = vadd.f32 0.0, %v592
        %594 = vmatprep.mubr.f32.mxu0 %v267
        %595 = vmatmul.mubr.f32.gmra.mrb[0].mxu0 %v266
        %v596 = vpop.f32.mrb[0].mxu0
        %v597 = vadd.f32 0.0, %v596
        %v598 = vpop.f32.mrb[0].mxu0
        %v599 = vadd.f32 0.0, %v598
        %600 = vmatprep.mubr.f32.mxu0 %v271
        %601 = vmatmul.mubr.f32.gmra.mrb[0].mxu0 %v270
        %v602 = vpop.f32.mrb[0].mxu0
        %v603 = vadd.f32 0.0, %v602
        %v604 = vpop.f32.mrb[0].mxu0
        %v605 = vadd.f32 0.0, %v604
        %606 = vmatprep.mubr.f32.mxu0 %v275
        %607 = vmatmul.mubr.f32.gmra.mrb[0].mxu0 %v274
        %v608 = vpop.f32.mrb[0].mxu0
        %v609 = vadd.f32 0.0, %v608
        %v610 = vpop.f32.mrb[0].mxu0
        %v611 = vadd.f32 0.0, %v610
        %612 = vmatprep.mubr.f32.mxu0 %v279
        %613 = vmatmul.mubr.f32.gmra.mrb[0].mxu0 %v278
        %v614 = vpop.f32.mrb[0].mxu0
        %v615 = vadd.f32 0.0, %v614
        %v616 = vpop.f32.mrb[0].mxu0
        %v617 = vadd.f32 0.0, %v616
        %618 = vmatprep.mubr.f32.mxu0 %v283
        %619 = vmatmul.mubr.f32.gmra.mrb[0].mxu0 %v282
        %v620 = vpop.f32.mrb[0].mxu0
        %v621 = vadd.f32 0.0, %v620
        %v622 = vpop.f32.mrb[0].mxu0
        %v623 = vadd.f32 0.0, %v622
        %624 = vmatprep.mubr.f32.mxu0 %v287
        %625 = vmatmul.mubr.f32.gmra.mrb[0].mxu0 %v286
        %v626 = vpop.f32.mrb[0].mxu0
        %v627 = vadd.f32 0.0, %v626
        %v628 = vpop.f32.mrb[0].mxu0
        %v629 = vadd.f32 0.0, %v628
        %630 = vmatprep.mubr.f32.mxu0 %v291
        %631 = vmatmul.mubr.f32.gmra.mrb[0].mxu0 %v290
        %v632 = vpop.f32.mrb[0].mxu0
        %v633 = vadd.f32 0.0, %v632
        %v634 = vpop.f32.mrb[0].mxu0
        %v635 = vadd.f32 0.0, %v634
        %636 = vmatprep.mubr.f32.mxu0 %v295
        %637 = vmatmul.mubr.f32.gmra.mrb[0].mxu0 %v294
        %v638 = vpop.f32.mrb[0].mxu0
        %v639 = vadd.f32 0.0, %v638
        %v640 = vpop.f32.mrb[0].mxu0
        %v641 = vadd.f32 0.0, %v640
        %642 = vmatprep.mubr.f32.mxu0 %v299
        %643 = vmatmul.mubr.f32.gmra.mrb[0].mxu0 %v298
        %v644 = vpop.f32.mrb[0].mxu0
        %v645 = vadd.f32 0.0, %v644
        %v646 = vpop.f32.mrb[0].mxu0
        %v647 = vadd.f32 0.0, %v646
        %648 = vmatprep.mubr.f32.mxu0 %v303
        %649 = vmatmul.mubr.f32.gmra.mrb[0].mxu0 %v302
        %v650 = vpop.f32.mrb[0].mxu0
        %v651 = vadd.f32 0.0, %v650
        %v652 = vpop.f32.mrb[0].mxu0
        %v653 = vadd.f32 0.0, %v652
        %654 = vmatprep.mubr.f32.mxu0 %v307
        %655 = vmatmul.mubr.f32.gmra.mrb[0].mxu0 %v306
        %v656 = vpop.f32.mrb[0].mxu0
        %v657 = vadd.f32 0.0, %v656
        %v658 = vpop.f32.mrb[0].mxu0
        %v659 = vadd.f32 0.0, %v658
        %660 = vmatprep.mubr.f32.mxu0 %v311
        %661 = vmatmul.mubr.f32.gmra.mrb[0].mxu0 %v310
        %v662 = vpop.f32.mrb[0].mxu0
        %v663 = vadd.f32 0.0, %v662
        %v664 = vpop.f32.mrb[0].mxu0
        %v665 = vadd.f32 0.0, %v664
        %666 = vmatprep.mubr.f32.mxu0 %v315
        %667 = vmatmul.mubr.f32.gmra.mrb[0].mxu0 %v314
        %v668 = vpop.f32.mrb[0].mxu0
        %v669 = vadd.f32 0.0, %v668
        %v670 = vpop.f32.mrb[0].mxu0
        %v671 = vadd.f32 0.0, %v670
        %672 = vmatprep.mubr.f32.mxu0 %v319
        %673 = vmatmul.mubr.f32.gmra.mrb[0].mxu0 %v318
        %v674 = vpop.f32.mrb[0].mxu0
        %v675 = vadd.f32 0.0, %v674
        %v676 = vpop.f32.mrb[0].mxu0
        %v677 = vadd.f32 0.0, %v676
        %678 = vmatprep.mubr.f32.mxu0 %v323
        %679 = vmatmul.mubr.f32.gmra.mrb[0].mxu0 %v322
        %v680 = vpop.f32.mrb[0].mxu0
        %v681 = vadd.f32 0.0, %v680
        %v682 = vpop.f32.mrb[0].mxu0
        %v683 = vadd.f32 0.0, %v682
        %684 = vmatprep.mubr.f32.mxu0 %v327
        %685 = vmatmul.mubr.f32.gmra.mrb[0].mxu0 %v326
        %v686 = vpop.f32.mrb[0].mxu0
        %v687 = vadd.f32 0.0, %v686
        %v688 = vpop.f32.mrb[0].mxu0
        %v689 = vadd.f32 0.0, %v688
        %690 = vmatprep.mubr.f32.mxu0 %v331
        %691 = vmatmul.mubr.f32.gmra.mrb[0].mxu0 %v330
        %v692 = vpop.f32.mrb[0].mxu0
        %v693 = vadd.f32 0.0, %v692
        %v694 = vpop.f32.mrb[0].mxu0
        %v695 = vadd.f32 0.0, %v694
        %696 = vmatprep.mubr.f32.mxu0 %v335
        %697 = vmatmul.mubr.f32.gmra.mrb[0].mxu0 %v334
        %v698 = vpop.f32.mrb[0].mxu0
        %v699 = vadd.f32 0.0, %v698
        %v700 = vpop.f32.mrb[0].mxu0
        %v701 = vadd.f32 0.0, %v700
        %702 = vmatprep.mubr.f32.mxu0 %v339
        %703 = vmatmul.mubr.f32.gmra.mrb[0].mxu0 %v338
        %v704 = vpop.f32.mrb[0].mxu0
        %v705 = vadd.f32 0.0, %v704
        %v706 = vpop.f32.mrb[0].mxu0
        %v707 = vadd.f32 0.0, %v706
        %708 = vmatprep.mubr.f32.mxu0 %v343
        %709 = vmatmul.mubr.f32.gmra.mrb[0].mxu0 %v342
        %v710 = vpop.f32.mrb[0].mxu0
        %v711 = vadd.f32 0.0, %v710
        %v712 = vpop.f32.mrb[0].mxu0
        %v713 = vadd.f32 0.0, %v712
        %714 = vmatprep.mubr.f32.mxu0 %v347
        %715 = vmatmul.mubr.f32.gmra.mrb[0].mxu0 %v346
        %v716 = vpop.f32.mrb[0].mxu0
        %v717 = vadd.f32 0.0, %v716
        %v718 = vpop.f32.mrb[0].mxu0
        %v719 = vadd.f32 0.0, %v718
        %720 = vmatprep.mubr.f32.mxu0 %v351
        %721 = vmatmul.mubr.f32.gmra.mrb[0].mxu0 %v350
        %v722 = vpop.f32.mrb[0].mxu0
        %v723 = vadd.f32 0.0, %v722
        %v724 = vpop.f32.mrb[0].mxu0
        %v725 = vadd.f32 0.0, %v724
        %726 = vmatprep.mubr.f32.mxu0 %v355
        %727 = vmatmul.mubr.f32.gmra.mrb[0].mxu0 %v354
        %v728 = vpop.f32.mrb[0].mxu0
        %v729 = vadd.f32 0.0, %v728
        %v730 = vpop.f32.mrb[0].mxu0
        %v731 = vadd.f32 0.0, %v730
        %732 = vmatprep.mubr.f32.mxu0 %v359
        %733 = vmatmul.mubr.f32.gmra.mrb[0].mxu0 %v358
        %v734 = vpop.f32.mrb[0].mxu0
        %v735 = vadd.f32 0.0, %v734
        %v736 = vpop.f32.mrb[0].mxu0
        %v737 = vadd.f32 0.0, %v736
        %738 = vmatprep.mubr.f32.mxu0 %v363
        %739 = vmatmul.mubr.f32.gmra.mrb[0].mxu0 %v362
        %v740 = vpop.f32.mrb[0].mxu0
        %v741 = vadd.f32 0.0, %v740
        %v742 = vpop.f32.mrb[0].mxu0
        %v743 = vadd.f32 0.0, %v742
        %744 = vmatprep.mubr.f32.mxu0 %v367
        %745 = vmatmul.mubr.f32.gmra.mrb[0].mxu0 %v366
        %v746 = vpop.f32.mrb[0].mxu0
        %v747 = vadd.f32 0.0, %v746
        %v748 = vpop.f32.mrb[0].mxu0
        %v749 = vadd.f32 0.0, %v748
        %750 = vmatprep.mubr.f32.mxu0 %v371
        %751 = vmatmul.mubr.f32.gmra.mrb[0].mxu0 %v370
        %v752 = vpop.f32.mrb[0].mxu0
        %v753 = vadd.f32 0.0, %v752
        %v754 = vpop.f32.mrb[0].mxu0
        %v755 = vadd.f32 0.0, %v754
        %756 = vmatprep.mubr.f32.mxu0 %v375
        %757 = vmatmul.mubr.f32.gmra.mrb[0].mxu0 %v374
        %v758 = vpop.f32.mrb[0].mxu0
        %v759 = vadd.f32 0.0, %v758
        %v760 = vpop.f32.mrb[0].mxu0
        %v761 = vadd.f32 0.0, %v760
        %762 = vdwg.mxu0
        %763 = vmatprep.subr.mxu0 %v443
        %764 = vmatpush1.msra.mxu0 %v442
        %765 = vmatprep.subr.mxu0 %v445
        %766 = vmatpush1.msra.mxu0 %v444
        %767 = vmatprep.subr.mxu0 %v447
        %768 = vmatpush1.msra.mxu0 %v446
        %769 = vmatprep.subr.mxu0 %v449
        %770 = vmatpush1.msra.mxu0 %v448
        %771 = vmatprep.subr.mxu0 %v451
        %772 = vmatpush1.msra.mxu0 %v450
        %773 = vmatprep.subr.mxu0 %v453
        %774 = vmatpush1.msra.mxu0 %v452
        %775 = vmatprep.subr.mxu0 %v455
        %776 = vmatpush1.msra.mxu0 %v454
        %777 = vmatprep.subr.mxu0 %v457
        %778 = vmatpush1.msra.mxu0 %v456
        %779 = vmatprep.subr.mxu0 %v459
        %780 = vmatpush1.msra.mxu0 %v458
        %781 = vmatprep.subr.mxu0 %v461
        %782 = vmatpush1.msra.mxu0 %v460
        %783 = vmatprep.subr.mxu0 %v463
        %784 = vmatpush1.msra.mxu0 %v462
        %785 = vmatprep.subr.mxu0 %v465
        %786 = vmatpush1.msra.mxu0 %v464
        %787 = vmatprep.subr.mxu0 %v467
        %788 = vmatpush1.msra.mxu0 %v466
        %789 = vmatprep.subr.mxu0 %v469
        %790 = vmatpush1.msra.mxu0 %v468
        %791 = vmatprep.subr.mxu0 %v471
        %792 = vmatpush1.msra.mxu0 %v470
        %793 = vmatprep.subr.mxu0 %v473
        %794 = vmatpush1.msra.mxu0 %v472
        %795 = vmatprep.subr.mxu0 %v475
        %796 = vmatpush1.msra.mxu0 %v474
        %797 = vmatprep.subr.mxu0 %v477
        %798 = vmatpush1.msra.mxu0 %v476
        %799 = vmatprep.subr.mxu0 %v479
        %800 = vmatpush1.msra.mxu0 %v478
        %801 = vmatprep.subr.mxu0 %v481
        %802 = vmatpush1.msra.mxu0 %v480
        %803 = vmatprep.subr.mxu0 %v483
        %804 = vmatpush1.msra.mxu0 %v482
        %805 = vmatprep.subr.mxu0 %v485
        %806 = vmatpush1.msra.mxu0 %v484
        %807 = vmatprep.subr.mxu0 %v487
        %808 = vmatpush1.msra.mxu0 %v486
        %809 = vmatprep.subr.mxu0 %v489
        %810 = vmatpush1.msra.mxu0 %v488
        %811 = vmatprep.subr.mxu0 %v491
        %812 = vmatpush1.msra.mxu0 %v490
        %813 = vmatprep.subr.mxu0 %v493
        %814 = vmatpush1.msra.mxu0 %v492
        %815 = vmatprep.subr.mxu0 %v495
        %816 = vmatpush1.msra.mxu0 %v494
        %817 = vmatprep.subr.mxu0 %v497
        %818 = vmatpush1.msra.mxu0 %v496
        %819 = vmatprep.subr.mxu0 %v499
        %820 = vmatpush1.msra.mxu0 %v498
        %821 = vmatprep.subr.mxu0 %v501
        %822 = vmatpush1.msra.mxu0 %v500
        %823 = vmatprep.subr.mxu0 %v503
        %824 = vmatpush1.msra.mxu0 %v502
        %825 = vmatprep.subr.mxu0 %v505
        %826 = vmatpush1.msra.mxu0 %v504
        %827 = vmatprep.mubr.f32.mxu0 %v253
        %828 = vmatmul.mubr.f32.gmra.mrb[0].mxu0 %v252
        %v829 = vpop.f32.mrb[0].mxu0
        %v830 = vadd.f32 %v573, %v829
        %v831 = vpop.f32.mrb[0].mxu0
        %v832 = vadd.f32 %v575, %v831
        %833 = vmatprep.mubr.f32.mxu0 %v257
        %834 = vmatmul.mubr.f32.gmra.mrb[0].mxu0 %v256
        %v835 = vpop.f32.mrb[0].mxu0
        %v836 = vadd.f32 %v579, %v835
        %v837 = vpop.f32.mrb[0].mxu0
        %v838 = vadd.f32 %v581, %v837
        %839 = vmatprep.mubr.f32.mxu0 %v261
        %840 = vmatmul.mubr.f32.gmra.mrb[0].mxu0 %v260
        %v841 = vpop.f32.mrb[0].mxu0
        %v842 = vadd.f32 %v585, %v841
        %v843 = vpop.f32.mrb[0].mxu0
        %v844 = vadd.f32 %v587, %v843
        %845 = vmatprep.mubr.f32.mxu0 %v265
        %846 = vmatmul.mubr.f32.gmra.mrb[0].mxu0 %v264
        %v847 = vpop.f32.mrb[0].mxu0
        %v848 = vadd.f32 %v591, %v847
        %v849 = vpop.f32.mrb[0].mxu0
        %v850 = vadd.f32 %v593, %v849
        %851 = vmatprep.mubr.f32.mxu0 %v269
        %852 = vmatmul.mubr.f32.gmra.mrb[0].mxu0 %v268
        %v853 = vpop.f32.mrb[0].mxu0
        %v854 = vadd.f32 %v597, %v853
        %v855 = vpop.f32.mrb[0].mxu0
        %v856 = vadd.f32 %v599, %v855
        %857 = vmatprep.mubr.f32.mxu0 %v273
        %858 = vmatmul.mubr.f32.gmra.mrb[0].mxu0 %v272
        %v859 = vpop.f32.mrb[0].mxu0
        %v860 = vadd.f32 %v603, %v859
        %v861 = vpop.f32.mrb[0].mxu0
        %v862 = vadd.f32 %v605, %v861
        %863 = vmatprep.mubr.f32.mxu0 %v277
        %864 = vmatmul.mubr.f32.gmra.mrb[0].mxu0 %v276
        %v865 = vpop.f32.mrb[0].mxu0
        %v866 = vadd.f32 %v609, %v865
        %v867 = vpop.f32.mrb[0].mxu0
        %v868 = vadd.f32 %v611, %v867
        %869 = vmatprep.mubr.f32.mxu0 %v281
        %870 = vmatmul.mubr.f32.gmra.mrb[0].mxu0 %v280
        %v871 = vpop.f32.mrb[0].mxu0
        %v872 = vadd.f32 %v615, %v871
        %v873 = vpop.f32.mrb[0].mxu0
        %v874 = vadd.f32 %v617, %v873
        %875 = vmatprep.mubr.f32.mxu0 %v285
        %876 = vmatmul.mubr.f32.gmra.mrb[0].mxu0 %v284
        %v877 = vpop.f32.mrb[0].mxu0
        %v878 = vadd.f32 %v621, %v877
        %v879 = vpop.f32.mrb[0].mxu0
        %v880 = vadd.f32 %v623, %v879
        %881 = vmatprep.mubr.f32.mxu0 %v289
        %882 = vmatmul.mubr.f32.gmra.mrb[0].mxu0 %v288
        %v883 = vpop.f32.mrb[0].mxu0
        %v884 = vadd.f32 %v627, %v883
        %v885 = vpop.f32.mrb[0].mxu0
        %v886 = vadd.f32 %v629, %v885
        %887 = vmatprep.mubr.f32.mxu0 %v293
        %888 = vmatmul.mubr.f32.gmra.mrb[0].mxu0 %v292
        %v889 = vpop.f32.mrb[0].mxu0
        %v890 = vadd.f32 %v633, %v889
        %v891 = vpop.f32.mrb[0].mxu0
        %v892 = vadd.f32 %v635, %v891
        %893 = vmatprep.mubr.f32.mxu0 %v297
        %894 = vmatmul.mubr.f32.gmra.mrb[0].mxu0 %v296
        %v895 = vpop.f32.mrb[0].mxu0
        %v896 = vadd.f32 %v639, %v895
        %v897 = vpop.f32.mrb[0].mxu0
        %v898 = vadd.f32 %v641, %v897
        %899 = vmatprep.mubr.f32.mxu0 %v301
        %900 = vmatmul.mubr.f32.gmra.mrb[0].mxu0 %v300
        %v901 = vpop.f32.mrb[0].mxu0
        %v902 = vadd.f32 %v645, %v901
        %v903 = vpop.f32.mrb[0].mxu0
        %v904 = vadd.f32 %v647, %v903
        %905 = vmatprep.mubr.f32.mxu0 %v305
        %906 = vmatmul.mubr.f32.gmra.mrb[0].mxu0 %v304
        %v907 = vpop.f32.mrb[0].mxu0
        %v908 = vadd.f32 %v651, %v907
        %v909 = vpop.f32.mrb[0].mxu0
        %v910 = vadd.f32 %v653, %v909
        %911 = vmatprep.mubr.f32.mxu0 %v309
        %912 = vmatmul.mubr.f32.gmra.mrb[0].mxu0 %v308
        %v913 = vpop.f32.mrb[0].mxu0
        %v914 = vadd.f32 %v657, %v913
        %v915 = vpop.f32.mrb[0].mxu0
        %v916 = vadd.f32 %v659, %v915
        %917 = vmatprep.mubr.f32.mxu0 %v313
        %918 = vmatmul.mubr.f32.gmra.mrb[0].mxu0 %v312
        %v919 = vpop.f32.mrb[0].mxu0
        %v920 = vadd.f32 %v663, %v919
        %v921 = vpop.f32.mrb[0].mxu0
        %v922 = vadd.f32 %v665, %v921
        %923 = vmatprep.mubr.f32.mxu0 %v317
        %924 = vmatmul.mubr.f32.gmra.mrb[0].mxu0 %v316
        %v925 = vpop.f32.mrb[0].mxu0
        %v926 = vadd.f32 %v669, %v925
        %v927 = vpop.f32.mrb[0].mxu0
        %v928 = vadd.f32 %v671, %v927
        %929 = vmatprep.mubr.f32.mxu0 %v321
        %930 = vmatmul.mubr.f32.gmra.mrb[0].mxu0 %v320
        %v931 = vpop.f32.mrb[0].mxu0
        %v932 = vadd.f32 %v675, %v931
        %v933 = vpop.f32.mrb[0].mxu0
        %v934 = vadd.f32 %v677, %v933
        %935 = vmatprep.mubr.f32.mxu0 %v325
        %936 = vmatmul.mubr.f32.gmra.mrb[0].mxu0 %v324
        %v937 = vpop.f32.mrb[0].mxu0
        %v938 = vadd.f32 %v681, %v937
        %v939 = vpop.f32.mrb[0].mxu0
        %v940 = vadd.f32 %v683, %v939
        %941 = vmatprep.mubr.f32.mxu0 %v329
        %942 = vmatmul.mubr.f32.gmra.mrb[0].mxu0 %v328
        %v943 = vpop.f32.mrb[0].mxu0
        %v944 = vadd.f32 %v687, %v943
        %v945 = vpop.f32.mrb[0].mxu0
        %v946 = vadd.f32 %v689, %v945
        %947 = vmatprep.mubr.f32.mxu0 %v333
        %948 = vmatmul.mubr.f32.gmra.mrb[0].mxu0 %v332
        %v949 = vpop.f32.mrb[0].mxu0
        %v950 = vadd.f32 %v693, %v949
        %v951 = vpop.f32.mrb[0].mxu0
        %v952 = vadd.f32 %v695, %v951
        %953 = vmatprep.mubr.f32.mxu0 %v337
        %954 = vmatmul.mubr.f32.gmra.mrb[0].mxu0 %v336
        %v955 = vpop.f32.mrb[0].mxu0
        %v956 = vadd.f32 %v699, %v955
        %v957 = vpop.f32.mrb[0].mxu0
        %v958 = vadd.f32 %v701, %v957
        %959 = vmatprep.mubr.f32.mxu0 %v341
        %960 = vmatmul.mubr.f32.gmra.mrb[0].mxu0 %v340
        %v961 = vpop.f32.mrb[0].mxu0
        %v962 = vadd.f32 %v705, %v961
        %v963 = vpop.f32.mrb[0].mxu0
        %v964 = vadd.f32 %v707, %v963
        %965 = vmatprep.mubr.f32.mxu0 %v345
        %966 = vmatmul.mubr.f32.gmra.mrb[0].mxu0 %v344
        %v967 = vpop.f32.mrb[0].mxu0
        %v968 = vadd.f32 %v711, %v967
        %v969 = vpop.f32.mrb[0].mxu0
        %v970 = vadd.f32 %v713, %v969
        %971 = vmatprep.mubr.f32.mxu0 %v349
        %972 = vmatmul.mubr.f32.gmra.mrb[0].mxu0 %v348
        %v973 = vpop.f32.mrb[0].mxu0
        %v974 = vadd.f32 %v717, %v973
        %v975 = vpop.f32.mrb[0].mxu0
        %v976 = vadd.f32 %v719, %v975
        %977 = vmatprep.mubr.f32.mxu0 %v353
        %978 = vmatmul.mubr.f32.gmra.mrb[0].mxu0 %v352
        %v979 = vpop.f32.mrb[0].mxu0
        %v980 = vadd.f32 %v723, %v979
        %v981 = vpop.f32.mrb[0].mxu0
        %v982 = vadd.f32 %v725, %v981
        %983 = vmatprep.mubr.f32.mxu0 %v357
        %984 = vmatmul.mubr.f32.gmra.mrb[0].mxu0 %v356
        %v985 = vpop.f32.mrb[0].mxu0
        %v986 = vadd.f32 %v729, %v985
        %v987 = vpop.f32.mrb[0].mxu0
        %v988 = vadd.f32 %v731, %v987
        %989 = vmatprep.mubr.f32.mxu0 %v361
        %990 = vmatmul.mubr.f32.gmra.mrb[0].mxu0 %v360
        %v991 = vpop.f32.mrb[0].mxu0
        %v992 = vadd.f32 %v735, %v991
        %v993 = vpop.f32.mrb[0].mxu0
        %v994 = vadd.f32 %v737, %v993
        %995 = vmatprep.mubr.f32.mxu0 %v365
        %996 = vmatmul.mubr.f32.gmra.mrb[0].mxu0 %v364
        %v997 = vpop.f32.mrb[0].mxu0
        %v998 = vadd.f32 %v741, %v997
        %v999 = vpop.f32.mrb[0].mxu0
        %v1000 = vadd.f32 %v743, %v999
        %1001 = vmatprep.mubr.f32.mxu0 %v369
        %1002 = vmatmul.mubr.f32.gmra.mrb[0].mxu0 %v368
        %v1003 = vpop.f32.mrb[0].mxu0
        %v1004 = vadd.f32 %v747, %v1003
        %v1005 = vpop.f32.mrb[0].mxu0
        %v1006 = vadd.f32 %v749, %v1005
        %1007 = vmatprep.mubr.f32.mxu0 %v373
        %1008 = vmatmul.mubr.f32.gmra.mrb[0].mxu0 %v372
        %v1009 = vpop.f32.mrb[0].mxu0
        %v1010 = vadd.f32 %v753, %v1009
        %v1011 = vpop.f32.mrb[0].mxu0
        %v1012 = vadd.f32 %v755, %v1011
        %1013 = vmatprep.mubr.f32.mxu0 %v377
        %1014 = vmatmul.mubr.f32.gmra.mrb[0].mxu0 %v376
        %v1015 = vpop.f32.mrb[0].mxu0
        %v1016 = vadd.f32 %v759, %v1015
        %v1017 = vpop.f32.mrb[0].mxu0
        %v1018 = vadd.f32 %v761, %v1017
        %1019 = vdwg.mxu0
        %v1020 = vmul.f32 %v830, 0.1
        %v1021 = vmul.f32 %v832, 0.1
        %v1022 = vmul.f32 %v836, 0.1
        %v1023 = vmul.f32 %v838, 0.1
        %v1024 = vmul.f32 %v842, 0.1
        %v1025 = vmul.f32 %v844, 0.1
        %v1026 = vmul.f32 %v848, 0.1
        %v1027 = vmul.f32 %v850, 0.1
        %v1028 = vmul.f32 %v854, 0.1
        %v1029 = vmul.f32 %v856, 0.1
        %v1030 = vmul.f32 %v860, 0.1
        %v1031 = vmul.f32 %v862, 0.1
        %v1032 = vmul.f32 %v866, 0.1
        %v1033 = vmul.f32 %v868, 0.1
        %v1034 = vmul.f32 %v872, 0.1
        %v1035 = vmul.f32 %v874, 0.1
        %v1036 = vmul.f32 %v878, 0.1
        %v1037 = vmul.f32 %v880, 0.1
        %v1038 = vmul.f32 %v884, 0.1
        %v1039 = vmul.f32 %v886, 0.1
        %v1040 = vmul.f32 %v890, 0.1
        %v1041 = vmul.f32 %v892, 0.1
        %v1042 = vmul.f32 %v896, 0.1
        %v1043 = vmul.f32 %v898, 0.1
        %v1044 = vmul.f32 %v902, 0.1
        %v1045 = vmul.f32 %v904, 0.1
        %v1046 = vmul.f32 %v908, 0.1
        %v1047 = vmul.f32 %v910, 0.1
        %v1048 = vmul.f32 %v914, 0.1
        %v1049 = vmul.f32 %v916, 0.1
        %v1050 = vmul.f32 %v920, 0.1
        %v1051 = vmul.f32 %v922, 0.1
        %v1052 = vmul.f32 %v926, 0.1
        %v1053 = vmul.f32 %v928, 0.1
        %v1054 = vmul.f32 %v932, 0.1
        %v1055 = vmul.f32 %v934, 0.1
        %v1056 = vmul.f32 %v938, 0.1
        %v1057 = vmul.f32 %v940, 0.1
        %v1058 = vmul.f32 %v944, 0.1
        %v1059 = vmul.f32 %v946, 0.1
        %v1060 = vmul.f32 %v950, 0.1
        %v1061 = vmul.f32 %v952, 0.1
        %v1062 = vmul.f32 %v956, 0.1
        %v1063 = vmul.f32 %v958, 0.1
        %v1064 = vmul.f32 %v962, 0.1
        %v1065 = vmul.f32 %v964, 0.1
        %v1066 = vmul.f32 %v968, 0.1
        %v1067 = vmul.f32 %v970, 0.1
        %v1068 = vmul.f32 %v974, 0.1
        %v1069 = vmul.f32 %v976, 0.1
        %v1070 = vmul.f32 %v980, 0.1
        %v1071 = vmul.f32 %v982, 0.1
        %v1072 = vmul.f32 %v986, 0.1
        %v1073 = vmul.f32 %v988, 0.1
        %v1074 = vmul.f32 %v992, 0.1
        %v1075 = vmul.f32 %v994, 0.1
        %v1076 = vmul.f32 %v998, 0.1
        %v1077 = vmul.f32 %v1000, 0.1
        %v1078 = vmul.f32 %v1004, 0.1
        %v1079 = vmul.f32 %v1006, 0.1
        %v1080 = vmul.f32 %v1010, 0.1
        %v1081 = vmul.f32 %v1012, 0.1
        %v1082 = vmul.f32 %v1016, 0.1
        %v1083 = vmul.f32 %v1018, 0.1
        %v1084 = vld [vmem:[%s246] sm:$0x3]
        %v1086 = vlaneseq
        %v1087 = vshrl.u32 %v1086, 7
        %v1088 = vsub.s32 0, %v1087
        %v1089 = vrot.slane %v1084, %v1088
        %v1090 = vlaneseq
        %v1091 = vshrl.u32 %v1090, 7
        %v1092 = vsub.s32 1, %v1091
        %v1093 = vrot.slane %v1084, %v1092
        %v1096 = vadd.f32 %v1020, %v1089
        %v1097 = vadd.f32 %v1021, %v1093
        %v1098 = vadd.f32 %v1022, %v1089
        %v1099 = vadd.f32 %v1023, %v1093
        %v1100 = vadd.f32 %v1024, %v1089
        %v1101 = vadd.f32 %v1025, %v1093
        %v1102 = vadd.f32 %v1026, %v1089
        %v1103 = vadd.f32 %v1027, %v1093
        %v1104 = vadd.f32 %v1028, %v1089
        %v1105 = vadd.f32 %v1029, %v1093
        %v1106 = vadd.f32 %v1030, %v1089
        %v1107 = vadd.f32 %v1031, %v1093
        %v1108 = vadd.f32 %v1032, %v1089
        %v1109 = vadd.f32 %v1033, %v1093
        %v1110 = vadd.f32 %v1034, %v1089
        %v1111 = vadd.f32 %v1035, %v1093
        %v1112 = vadd.f32 %v1036, %v1089
        %v1113 = vadd.f32 %v1037, %v1093
        %v1114 = vadd.f32 %v1038, %v1089
        %v1115 = vadd.f32 %v1039, %v1093
        %v1116 = vadd.f32 %v1040, %v1089
        %v1117 = vadd.f32 %v1041, %v1093
        %v1118 = vadd.f32 %v1042, %v1089
        %v1119 = vadd.f32 %v1043, %v1093
        %v1120 = vadd.f32 %v1044, %v1089
        %v1121 = vadd.f32 %v1045, %v1093
        %v1122 = vadd.f32 %v1046, %v1089
        %v1123 = vadd.f32 %v1047, %v1093
        %v1124 = vadd.f32 %v1048, %v1089
        %v1125 = vadd.f32 %v1049, %v1093
        %v1126 = vadd.f32 %v1050, %v1089
        %v1127 = vadd.f32 %v1051, %v1093
        %v1128 = vadd.f32 %v1052, %v1089
        %v1129 = vadd.f32 %v1053, %v1093
        %v1130 = vadd.f32 %v1054, %v1089
        %v1131 = vadd.f32 %v1055, %v1093
        %v1132 = vadd.f32 %v1056, %v1089
        %v1133 = vadd.f32 %v1057, %v1093
        %v1134 = vadd.f32 %v1058, %v1089
        %v1135 = vadd.f32 %v1059, %v1093
        %v1136 = vadd.f32 %v1060, %v1089
        %v1137 = vadd.f32 %v1061, %v1093
        %v1138 = vadd.f32 %v1062, %v1089
        %v1139 = vadd.f32 %v1063, %v1093
        %v1140 = vadd.f32 %v1064, %v1089
        %v1141 = vadd.f32 %v1065, %v1093
        %v1142 = vadd.f32 %v1066, %v1089
        %v1143 = vadd.f32 %v1067, %v1093
        %v1144 = vadd.f32 %v1068, %v1089
        %v1145 = vadd.f32 %v1069, %v1093
        %v1146 = vadd.f32 %v1070, %v1089
        %v1147 = vadd.f32 %v1071, %v1093
        %v1148 = vadd.f32 %v1072, %v1089
        %v1149 = vadd.f32 %v1073, %v1093
        %v1150 = vadd.f32 %v1074, %v1089
        %v1151 = vadd.f32 %v1075, %v1093
        %v1152 = vadd.f32 %v1076, %v1089
        %v1153 = vadd.f32 %v1077, %v1093
        %v1154 = vadd.f32 %v1078, %v1089
        %v1155 = vadd.f32 %v1079, %v1093
        %v1156 = vadd.f32 %v1080, %v1089
        %v1157 = vadd.f32 %v1081, %v1093
        %v1158 = vadd.f32 %v1082, %v1089
        %v1159 = vadd.f32 %v1083, %v1093
        %1160 = vst [vmem:[%s240] sm:$0xff] %v1096
        %1161 = vst [vmem:[%s240 + $0x8] sm:$0xff] %v1097
        %1162 = vst [vmem:[%s240 + $0x10] sm:$0xff] %v1098
        %1163 = vst [vmem:[%s240 + $0x18] sm:$0xff] %v1099
        %1164 = vst [vmem:[%s240 + $0x20] sm:$0xff] %v1100
        %1165 = vst [vmem:[%s240 + $0x28] sm:$0xff] %v1101
        %1166 = vst [vmem:[%s240 + $0x30] sm:$0xff] %v1102
        %1167 = vst [vmem:[%s240 + $0x38] sm:$0xff] %v1103
        %1168 = vst [vmem:[%s240 + $0x40] sm:$0xff] %v1104
        %1169 = vst [vmem:[%s240 + $0x48] sm:$0xff] %v1105
        %1170 = vst [vmem:[%s240 + $0x50] sm:$0xff] %v1106
        %1171 = vst [vmem:[%s240 + $0x58] sm:$0xff] %v1107
        %1172 = vst [vmem:[%s240 + $0x60] sm:$0xff] %v1108
        %1173 = vst [vmem:[%s240 + $0x68] sm:$0xff] %v1109
        %1174 = vst [vmem:[%s240 + $0x70] sm:$0xff] %v1110
        %1175 = vst [vmem:[%s240 + $0x78] sm:$0xff] %v1111
        %1176 = vst [vmem:[%s240 + $0x80] sm:$0xff] %v1112
        %1177 = vst [vmem:[%s240 + $0x88] sm:$0xff] %v1113
        %1178 = vst [vmem:[%s240 + $0x90] sm:$0xff] %v1114
        %1179 = vst [vmem:[%s240 + $0x98] sm:$0xff] %v1115
        %1180 = vst [vmem:[%s240 + $0xa0] sm:$0xff] %v1116
        %1181 = vst [vmem:[%s240 + $0xa8] sm:$0xff] %v1117
        %1182 = vst [vmem:[%s240 + $0xb0] sm:$0xff] %v1118
        %1183 = vst [vmem:[%s240 + $0xb8] sm:$0xff] %v1119
        %1184 = vst [vmem:[%s240 + $0xc0] sm:$0xff] %v1120
        %1185 = vst [vmem:[%s240 + $0xc8] sm:$0xff] %v1121
        %1186 = vst [vmem:[%s240 + $0xd0] sm:$0xff] %v1122
        %1187 = vst [vmem:[%s240 + $0xd8] sm:$0xff] %v1123
        %1188 = vst [vmem:[%s240 + $0xe0] sm:$0xff] %v1124
        %1189 = vst [vmem:[%s240 + $0xe8] sm:$0xff] %v1125
        %1190 = vst [vmem:[%s240 + $0xf0] sm:$0xff] %v1126
        %1191 = vst [vmem:[%s240 + $0xf8] sm:$0xff] %v1127
        %1192 = vst [vmem:[%s240 + $0x100] sm:$0xff] %v1128
        %1193 = vst [vmem:[%s240 + $0x108] sm:$0xff] %v1129
        %1194 = vst [vmem:[%s240 + $0x110] sm:$0xff] %v1130
        %1195 = vst [vmem:[%s240 + $0x118] sm:$0xff] %v1131
        %1196 = vst [vmem:[%s240 + $0x120] sm:$0xff] %v1132
        %1197 = vst [vmem:[%s240 + $0x128] sm:$0xff] %v1133
        %1198 = vst [vmem:[%s240 + $0x130] sm:$0xff] %v1134
        %1199 = vst [vmem:[%s240 + $0x138] sm:$0xff] %v1135
        %1200 = vst [vmem:[%s240 + $0x140] sm:$0xff] %v1136
        %1201 = vst [vmem:[%s240 + $0x148] sm:$0xff] %v1137
        %1202 = vst [vmem:[%s240 + $0x150] sm:$0xff] %v1138
        %1203 = vst [vmem:[%s240 + $0x158] sm:$0xff] %v1139
        %1204 = vst [vmem:[%s240 + $0x160] sm:$0xff] %v1140
        %1205 = vst [vmem:[%s240 + $0x168] sm:$0xff] %v1141
        %1206 = vst [vmem:[%s240 + $0x170] sm:$0xff] %v1142
        %1207 = vst [vmem:[%s240 + $0x178] sm:$0xff] %v1143
        %1208 = vst [vmem:[%s240 + $0x180] sm:$0xff] %v1144
        %1209 = vst [vmem:[%s240 + $0x188] sm:$0xff] %v1145
        %1210 = vst [vmem:[%s240 + $0x190] sm:$0xff] %v1146
        %1211 = vst [vmem:[%s240 + $0x198] sm:$0xff] %v1147
        %1212 = vst [vmem:[%s240 + $0x1a0] sm:$0xff] %v1148
        %1213 = vst [vmem:[%s240 + $0x1a8] sm:$0xff] %v1149
        %1214 = vst [vmem:[%s240 + $0x1b0] sm:$0xff] %v1150
        %1215 = vst [vmem:[%s240 + $0x1b8] sm:$0xff] %v1151
        %1216 = vst [vmem:[%s240 + $0x1c0] sm:$0xff] %v1152
        %1217 = vst [vmem:[%s240 + $0x1c8] sm:$0xff] %v1153
        %1218 = vst [vmem:[%s240 + $0x1d0] sm:$0xff] %v1154
        %1219 = vst [vmem:[%s240 + $0x1d8] sm:$0xff] %v1155
        %1220 = vst [vmem:[%s240 + $0x1e0] sm:$0xff] %v1156
        %1221 = vst [vmem:[%s240 + $0x1e8] sm:$0xff] %v1157
        %1222 = vst [vmem:[%s240 + $0x1f0] sm:$0xff] %v1158
        %1223 = vst [vmem:[%s240 + $0x1f8] sm:$0xff] %v1159
        %s1224 = sand.u32 %s121, 1
        %s1225 = scalar_lea.sflag [#allocation4], %s1224
        %s1226 = sand.u32 %s121, 1
        %s1227 = smul.addr %s1226, 512
        %s1228 = scalar_lea.vmem [#allocation7], %s1227
        // Predicated region
        $region41: #{tpu_custom_call.1} parent=31 // pred_check
          %p1229 = pneg %p131
        $region42: #{tpu_custom_call.1} parent=31 // pred_check_branch
          %1231 = sbr.rel (%p1229) target = $region44
        $region43: #{tpu_custom_call.1} parent=31 // pred_region
          %s1232 = smul.u32 32, %s25
          %s1233 = smul.u32 2, %s26
          %s1235 = ssub.s32 8192, 8192
          %1236 = vsyncadd %s1225, %s1235
          %s1237 = smul.addr %s1232, 4
          %s1238 = sadd.s32 %s1233, %s1237
          %s1239 = smul.addr %s1238, 128
          %s1240 = scalar_lea.hbm %s3, %s1239
          %s1241 = sshll.u32 %s1228, 4
          %s1242 = int_to_ptr.vmem [resolvable:$true] %s1241
          %1247 = dma.vmem_to_hbm [thread:$0]  %s1242, 8192, %s1240, %s1225, 256, 512, 16
        $region44: #{tpu_custom_call.1} parent=31 // pred_fallthru
          _
      $region32: #{tpu_custom_call.1} parent=5 // pred_fallthru
        _
      %p1248 = scmp.le.s32.totalorder 2, %s16
      // Predicated region
      $region45: #{tpu_custom_call.1} parent=5 // pred_check
        %p1249 = pneg %p1248
      $region46: #{tpu_custom_call.1} parent=5 // pred_check_branch
        %1251 = sbr.rel (%p1249) target = $region48
      $region47: #{tpu_custom_call.1} parent=5 // pred_region
        %s1252 = ssub.s32 %s16, 2
        // Predicated region
        $region49: #{tpu_custom_call.1} parent=47 // pred_check
          %p1253 = pneg %p137
        $region50: #{tpu_custom_call.1} parent=47 // pred_check_branch
          %1255 = sbr.rel (%p1253) target = $region52
        $region51: #{tpu_custom_call.1} parent=47 // pred_region
          %s1256 = sand.u32 %s122, 1
          %s1257 = scalar_lea.sflag [#allocation4], %s1256
          %s1258 = sand.u32 %s122, 1
          %s1259 = smul.addr %s1258, 512
          %s1260 = scalar_lea.vmem [#allocation7], %s1259
          %1261 = dma.done %s1257, 8192
        $region52: #{tpu_custom_call.1} parent=47 // pred_fallthru
          _
      $region48: #{tpu_custom_call.1} parent=5 // pred_fallthru
        _
    $region6: #{tpu_custom_call.1} parent=1 // loop_footer
      %s20 = sadd.s32 1, %s16
    $region7: #{tpu_custom_call.1} parent=1 // loop_footer_branch
      %15 = sbr.rel target = $region3
    $region8: #{tpu_custom_call.1} parent=1 // loop_exit
      _
    %1262 = vsyncpa [#allocation3], 1
    %s1263 = scalar_lea.sflag [#allocation3], 1
    %1264 = vsyncpa %s1263, 1
    %1265 = vsyncpa [#allocation6], 1
    %s1266 = scalar_lea.sflag [#allocation6], 1
    %1267 = vsyncpa %s1266, 1
    %1268 = vsyncpa [#allocation4], 1
    %s1269 = scalar_lea.sflag [#allocation4], 1
    %1270 = vsyncpa %s1269, 1

</llo_original>
